<compile_context>
chip_gen: v7x
topology: tpu7x:2x2x1
jax: 0.10.0
libtpu: 0.0.40
codegen_flags: <defaults>
</compile_context>

<pallas_src>
import jax
import jax.numpy as jnp
from jax.experimental import pallas as pl
from jax.experimental.pallas import tpu as pltpu


def reward_weight_kernel(x_ref, w1_ref, b1_ref, w2_ref, b2_ref, o_ref):
    # x: (TB, D)  w1: (D, H)  b1: (1, H)  w2: (H, D)  b2: (1, D)  out: (TB, D)
    x = x_ref[...]

    # Linear 1 + ReLU: (TB, D) @ (D, H) -> (TB, H).  Canonical matmul, contracts
    # x's last axis directly (no transpose of the streaming operand needed).
    # precision=HIGHEST keeps full-f32 MXU passes so the kernel matches the
    # XLA reference independent of default-precision settings.
    h = jnp.dot(x, w1_ref[...],
                preferred_element_type=jnp.float32,
                precision=jax.lax.Precision.HIGHEST)
    h = jnp.maximum(h + b1_ref[...], 0.0)

    # Linear 2: (TB, H) @ (H, D) -> (TB, D).
    logits = jnp.dot(h, w2_ref[...],
                     preferred_element_type=jnp.float32,
                     precision=jax.lax.Precision.HIGHEST) + b2_ref[...]

    # Softmax over the last axis (D).  Axis reductions (XLU) + exact divide:
    # rows sum to 1 up to f32 rounding (the approx reciprocal caused the
    # previous batched-case mismatch and is gone).
    m = jnp.max(logits, axis=-1, keepdims=True)
    e = jnp.exp(logits - m)
    s = jnp.sum(e, axis=-1, keepdims=True)
    o_ref[...] = (e / s).astype(o_ref.dtype)


def _default_block_b(batch):
    """Batch-tile heuristic.

    2048 rows ~ 7-8 MiB of per-step VMEM in this layout: big enough to
    amortize the ~0.35 us per-grid-step overhead, small enough for v5e's
    16 MiB default scoped VMEM, and guarantees a >=2-step grid for any
    batch > 2048 so the "parallel" axis can use v7x's two TensorCores.
    """
    max_block = 2048
    b8 = int(pl.cdiv(batch, 8)) * 8          # sublane multiple
    return b8 if b8 <= max_block else max_block


def reward_weight_net(x, w1, b1, w2, b2, *, block_b=None):
    """x: (B, D) f32; w1: (D, H); b1: (H,)/(1,H); w2: (H, D); b2: (D,)/(1,D) -> (B, D)."""
    B, D = x.shape
    H = w1.shape[1]
    b1 = b1.reshape(1, H)
    b2 = b2.reshape(1, D)

    if block_b is None:
        block_b = _default_block_b(B)
    block_b = max(8, int(pl.cdiv(block_b, 8)) * 8)   # sublane (8) multiple

    # Pad the batch to a multiple of the tile; padded rows are computed on
    # (harmless, finite softmax of the bias) and sliced off below.
    Bp = int(pl.cdiv(B, block_b)) * block_b
    xp = x if Bp == B else jnp.pad(x, ((0, Bp - B), (0, 0)))

    cost = pl.CostEstimate(
        flops=4 * Bp * D * H,                        # two matmuls
        transcendentals=Bp * D,                      # exp
        bytes_accessed=4 * (2 * Bp * D + 2 * D * H + H + D),
    )

    out = pl.pallas_call(
        reward_weight_kernel,
        out_shape=jax.ShapeDtypeStruct((Bp, D), jnp.float32),
        grid=(Bp // block_b,),
        in_specs=[
            pl.BlockSpec((block_b, D), lambda i: (i, 0)),   # activations (stream)
            pl.BlockSpec((D, H), lambda i: (0, 0)),         # W1 (VMEM-resident)
            pl.BlockSpec((1, H), lambda i: (0, 0)),         # b1
            pl.BlockSpec((H, D), lambda i: (0, 0)),         # W2
            pl.BlockSpec((1, D), lambda i: (0, 0)),         # b2
        ],
        out_specs=pl.BlockSpec((block_b, D), lambda i: (i, 0)),
        compiler_params=pltpu.CompilerParams(
            dimension_semantics=("parallel",),               # 2 TCs on v7x
            vmem_limit_bytes=32 * 1024 * 1024,
        ),
        cost_estimate=cost,
    )(xp, w1, b1, w2, b2)

    return out[:B]


def init_params(key, num_dimensions=4, hidden=64):
    """Deterministic init mimicking PyTorch nn.Linear default (uniform +-1/sqrt(fan_in))."""
    k1, k2, k3, k4 = jax.random.split(key, 4)
    bound1 = 1.0 / jnp.sqrt(jnp.float32(num_dimensions))
    bound2 = 1.0 / jnp.sqrt(jnp.float32(hidden))
    # Stored as (in, out): forward is x @ W + b.
    w1 = jax.random.uniform(k1, (num_dimensions, hidden), jnp.float32, -bound1, bound1)
    b1 = jax.random.uniform(k2, (1, hidden), jnp.float32, -bound1, bound1)
    w2 = jax.random.uniform(k3, (hidden, num_dimensions), jnp.float32, -bound2, bound2)
    b2 = jax.random.uniform(k4, (1, num_dimensions), jnp.float32, -bound2, bound2)
    return w1, b1, w2, b2


def reference(x, w1, b1, w2, b2):
    h = jnp.maximum(jnp.dot(x, w1, precision=jax.lax.Precision.HIGHEST) + b1, 0.0)
    logits = jnp.dot(h, w2, precision=jax.lax.Precision.HIGHEST) + b2
    return jax.nn.softmax(logits, axis=-1)


if __name__ == "__main__":
    key = jax.random.PRNGKey(0)
    k_params, k_x1, k_x2 = jax.random.split(key, 3)

    num_dimensions = 4
    hidden = 64
    w1, b1, w2, b2 = init_params(k_params, num_dimensions=num_dimensions, hidden=hidden)

    # With the exact softmax divide the kernel matches the reference to ~1e-6;
    # 1e-3 (same tolerance the previous revision failed) now has huge margin.
    ATOL = 1e-3
    RTOL = 1e-3

    # Case 1: the module's documented shape (batch=2, num_dims=4).
    batch = 2
    x = jax.random.normal(k_x1, (batch, num_dimensions), jnp.float32)
    out = jax.block_until_ready(reward_weight_net(x, w1, b1, w2, b2))
    ref = reference(x, w1, b1, w2, b2)
    assert out.shape == (batch, num_dimensions)
    assert jnp.allclose(out, ref, atol=ATOL, rtol=RTOL), "mismatch vs JAX reference (small batch)"
    assert jnp.allclose(jnp.sum(out, axis=-1), 1.0, atol=1e-4), "softmax rows must sum to ~1"

    # Case 2: multi-step grid + padded tail (block_b forced small so the
    # pipelined grid + padding path is exercised at small, fast shapes).
    batch2 = 640
    x2 = jax.random.normal(k_x2, (batch2, num_dimensions), jnp.float32)
    out2 = jax.block_until_ready(reward_weight_net(x2, w1, b1, w2, b2, block_b=256))
    ref2 = reference(x2, w1, b1, w2, b2)
    assert out2.shape == (batch2, num_dimensions)
    assert jnp.allclose(out2, ref2, atol=ATOL, rtol=RTOL), "mismatch vs JAX reference (batched)"
    assert jnp.allclose(jnp.sum(out2, axis=-1), 1.0, atol=1e-4), "softmax rows must sum to ~1"

    print("KERNEL_OK")
</pallas_src>

<mosaic_0001>
module attributes {stable_mosaic.version = 11 : i64} {
  func.func @reward_weight_kernel(%arg0: i32, %arg1: memref<8x4xf32, #tpu.memory_space<vmem>>, %arg2: memref<4x64xf32, #tpu.memory_space<vmem>>, %arg3: memref<1x64xf32, #tpu.memory_space<vmem>>, %arg4: memref<64x4xf32, #tpu.memory_space<vmem>>, %arg5: memref<1x4xf32, #tpu.memory_space<vmem>>, %arg6: memref<8x4xf32, #tpu.memory_space<vmem>>) attributes {dimension_semantics = [#tpu.dimension_semantics<parallel>], iteration_bounds = array<i64: 1>, scalar_prefetch = 0 : i64, scratch_operands = 0 : i64, tpu.core_type = #tpu.core_type<tc>, window_params = [{transform_indices = @transform_0, window_bounds = array<i64: 8, 4>}, {pipeline_mode = #tpu.pipeline_mode<synchronous>, transform_indices = @transform_1, window_bounds = array<i64: 4, 64>}, {pipeline_mode = #tpu.pipeline_mode<synchronous>, transform_indices = @transform_2, window_bounds = array<i64: 1, 64>}, {pipeline_mode = #tpu.pipeline_mode<synchronous>, transform_indices = @transform_3, window_bounds = array<i64: 64, 4>}, {pipeline_mode = #tpu.pipeline_mode<synchronous>, transform_indices = @transform_4, window_bounds = array<i64: 1, 4>}, {transform_indices = @transform_5, window_bounds = array<i64: 8, 4>}]} {
    %c0 = arith.constant 0 : index
    %c0_0 = arith.constant 0 : index
    %0 = vector.load %arg1[%c0, %c0_0] : memref<8x4xf32, #tpu.memory_space<vmem>>, vector<8x4xf32>
    %c0_1 = arith.constant 0 : index
    %c0_2 = arith.constant 0 : index
    %1 = vector.load %arg2[%c0_1, %c0_2] : memref<4x64xf32, #tpu.memory_space<vmem>>, vector<4x64xf32>
    %cst = arith.constant dense<0.000000e+00> : vector<8x64xf32>
    %2 = tpu.matmul %0, %1, %cst {dimension_numbers = #tpu.dot_dimension_numbers<[1], [0], [0], [1], [0, 0, 1, 1], [], []>, precision = #tpu.contract_precision<fp32>} : vector<8x4xf32>, vector<4x64xf32>, vector<8x64xf32> -> vector<8x64xf32>
    %c0_3 = arith.constant 0 : index
    %c0_4 = arith.constant 0 : index
    %3 = vector.load %arg3[%c0_3, %c0_4] : memref<1x64xf32, #tpu.memory_space<vmem>>, vector<1x64xf32>
    %4 = vector.broadcast %3 : vector<1x64xf32> to vector<8x64xf32>
    %5 = arith.addf %2, %4 : vector<8x64xf32>
    %cst_5 = arith.constant 0.000000e+00 : f32
    %6 = vector.broadcast %cst_5 : f32 to vector<8x64xf32>
    %7 = arith.maximumf %5, %6 : vector<8x64xf32>
    %c0_6 = arith.constant 0 : index
    %c0_7 = arith.constant 0 : index
    %8 = vector.load %arg4[%c0_6, %c0_7] : memref<64x4xf32, #tpu.memory_space<vmem>>, vector<64x4xf32>
    %cst_8 = arith.constant dense<0.000000e+00> : vector<8x4xf32>
    %9 = tpu.matmul %7, %8, %cst_8 {dimension_numbers = #tpu.dot_dimension_numbers<[1], [0], [0], [1], [0, 0, 1, 1], [], []>, precision = #tpu.contract_precision<fp32>} : vector<8x64xf32>, vector<64x4xf32>, vector<8x4xf32> -> vector<8x4xf32>
    %c0_9 = arith.constant 0 : index
    %c0_10 = arith.constant 0 : index
    %10 = vector.load %arg5[%c0_9, %c0_10] : memref<1x4xf32, #tpu.memory_space<vmem>>, vector<1x4xf32>
    %11 = vector.broadcast %10 : vector<1x4xf32> to vector<8x4xf32>
    %12 = arith.addf %9, %11 : vector<8x4xf32>
    %cst_11 = arith.constant dense<0xFF800000> : vector<8xf32>
    %13 = vector.multi_reduction <maximumf>, %12, %cst_11 [1] : vector<8x4xf32> to vector<8xf32>
    %14 = vector.shape_cast %13 : vector<8xf32> to vector<8x1xf32>
    %15 = vector.broadcast %14 : vector<8x1xf32> to vector<8x4xf32>
    %16 = arith.subf %12, %15 : vector<8x4xf32>
    %17 = math.exp %16 : vector<8x4xf32>
    %cst_12 = arith.constant dense<0.000000e+00> : vector<8xf32>
    %18 = vector.multi_reduction <add>, %17, %cst_12 [1] : vector<8x4xf32> to vector<8xf32>
    %19 = vector.shape_cast %18 : vector<8xf32> to vector<8x1xf32>
    %20 = vector.broadcast %19 : vector<8x1xf32> to vector<8x4xf32>
    %21 = arith.divf %17, %20 : vector<8x4xf32>
    %c0_13 = arith.constant 0 : index
    %c0_14 = arith.constant 0 : index
    %22 = vector.load %arg6[%c0_13, %c0_14] : memref<8x4xf32, #tpu.memory_space<vmem>>, vector<8x4xf32>
    tpu.vector_store %arg6[%c0_13, %c0_14], %21 {strides = array<i32>} : memref<8x4xf32, #tpu.memory_space<vmem>>, vector<8x4xf32>,
    return
  }
  func.func @transform_0(%arg0: i32) -> (i32, i32) {
    %c0_i32 = arith.constant 0 : i32
    %c0_i32_0 = arith.constant 0 : i32
    return %arg0, %c0_i32 : i32, i32
  }
  func.func @transform_1(%arg0: i32) -> (i32, i32) {
    %c0_i32 = arith.constant 0 : i32
    %c0_i32_0 = arith.constant 0 : i32
    %c0_i32_1 = arith.constant 0 : i32
    return %c0_i32, %c0_i32_0 : i32, i32
  }
  func.func @transform_2(%arg0: i32) -> (i32, i32) {
    %c0_i32 = arith.constant 0 : i32
    %c0_i32_0 = arith.constant 0 : i32
    %c0_i32_1 = arith.constant 0 : i32
    return %c0_i32, %c0_i32_0 : i32, i32
  }
  func.func @transform_3(%arg0: i32) -> (i32, i32) {
    %c0_i32 = arith.constant 0 : i32
    %c0_i32_0 = arith.constant 0 : i32
    %c0_i32_1 = arith.constant 0 : i32
    return %c0_i32, %c0_i32_0 : i32, i32
  }
  func.func @transform_4(%arg0: i32) -> (i32, i32) {
    %c0_i32 = arith.constant 0 : i32
    %c0_i32_0 = arith.constant 0 : i32
    %c0_i32_1 = arith.constant 0 : i32
    return %c0_i32, %c0_i32_0 : i32, i32
  }
  func.func @transform_5(%arg0: i32) -> (i32, i32) {
    %c0_i32 = arith.constant 0 : i32
    %c0_i32_0 = arith.constant 0 : i32
    return %arg0, %c0_i32 : i32, i32
  }
}

</mosaic_0001>

<llo_original>
// kernel: tpu_custom_call.1
$region0: #{tpu_custom_call.1}
  #allocation0 [shape = 'u32[]', space=smem, size = 0x4, offset = 0x4, fixed_abs, tag = 'smem constant byte address 0x4 - core index']
  #allocation1 [shape = 'u32[144,128]{1,0:T(1,128)}', space=vmem, size = 0x12000, scoped, tag = 'internal scratch']
  %s0 = inlined_call_operand.vmem [shape: f32[8,4], index: 0, kind: input, shape index: {}]
  %s1 = inlined_call_operand.vmem [shape: f32[4,64], index: 1, kind: input, shape index: {}]
  %s2 = inlined_call_operand.vmem [shape: f32[1,64], index: 2, kind: input, shape index: {}]
  %s3 = inlined_call_operand.vmem [shape: f32[64,4], index: 3, kind: input, shape index: {}]
  %s4 = inlined_call_operand.vmem [shape: f32[1,4], index: 4, kind: input, shape index: {}]
  %s5 = inlined_call_operand.vmem [shape: f32[8,4], index: 5, kind: output, shape index: {}]
  %s6 = sld [smem:[#allocation0]]
  $region30: #{tpu_custom_call.1} parent=0
    _
  %s8 = ssub.s32 1, %s6
  %s9 = scalar_select 0, %s8, %s6
  // Predicated region
  $region2: #{tpu_custom_call.1} parent=0 // pred_check
    _
  $region3: #{tpu_custom_call.1} parent=0 // pred_check_branch
    %11 = sbr.rel (0) target = $region5
  $region4: #{tpu_custom_call.1} parent=0 // pred_region
    _
  $region5: #{tpu_custom_call.1} parent=0 // pred_fallthru
    _
  // Predicated region
  $region6: #{tpu_custom_call.1} parent=0 // pred_check
    _
  $region7: #{tpu_custom_call.1} parent=0 // pred_check_branch
    %13 = sbr.rel (0) target = $region9
  $region8: #{tpu_custom_call.1} parent=0 // pred_region
    _
  $region9: #{tpu_custom_call.1} parent=0 // pred_fallthru
    _
  // Predicated region
  $region10: #{tpu_custom_call.1} parent=0 // pred_check
    _
  $region11: #{tpu_custom_call.1} parent=0 // pred_check_branch
    %15 = sbr.rel (0) target = $region13
  $region12: #{tpu_custom_call.1} parent=0 // pred_region
    _
  $region13: #{tpu_custom_call.1} parent=0 // pred_fallthru
    _
  // Predicated region
  $region14: #{tpu_custom_call.1} parent=0 // pred_check
    _
  $region15: #{tpu_custom_call.1} parent=0 // pred_check_branch
    %17 = sbr.rel (0) target = $region17
  $region16: #{tpu_custom_call.1} parent=0 // pred_region
    _
  $region17: #{tpu_custom_call.1} parent=0 // pred_fallthru
    _
  // Predicated region
  $region18: #{tpu_custom_call.1} parent=0 // pred_check
    _
  $region19: #{tpu_custom_call.1} parent=0 // pred_check_branch
    %19 = sbr.rel (0) target = $region21
  $region20: #{tpu_custom_call.1} parent=0 // pred_region
    _
  $region21: #{tpu_custom_call.1} parent=0 // pred_fallthru
    _
  %v20 = vld [vmem:[%s0] sm:$0xff]
  %v21 = vld [vmem:[%s1] sm:$0xf]
  %v22 = vld [vmem:[%s2] sm:$0x1]
  %v24 = vlaneseq
  %v25 = vshrl.u32 %v24, 7
  %v26 = vsub.s32 0, %v25
  %v27 = vrot.slane %v22, %v26
  %vm29 = vcmask 31744
  %v31 = vsel %vm29, %v20, 0
  %vm33 = vcmask 1043456
  %v35 = vsel %vm33, %v21, 0
  %37 = vmatprep.subr.mxu0 0.0
  %v38 = vand.u32 %v35, 4294901760
  %39 = vmatpush1.msra.mxu0 %v38
  %40 = vmatprep.subr.mxu0 0.0
  %41 = vmatpush1.msra.mxu0 0.0
  %42 = vmatprep.subr.mxu0 0.0
  %43 = vmatpush1.msra.mxu0 0.0
  %44 = vmatprep.subr.mxu0 0.0
  %45 = vmatpush1.msra.mxu0 0.0
  %46 = vmatprep.subr.mxu0 0.0
  %47 = vmatpush1.msra.mxu0 0.0
  %48 = vmatprep.subr.mxu0 0.0
  %49 = vmatpush1.msra.mxu0 0.0
  %50 = vmatprep.subr.mxu0 0.0
  %51 = vmatpush1.msra.mxu0 0.0
  %52 = vmatprep.subr.mxu0 0.0
  %53 = vmatpush1.msra.mxu0 0.0
  %54 = vmatprep.subr.mxu0 0.0
  %55 = vmatpush1.msra.mxu0 0.0
  %56 = vmatprep.subr.mxu0 0.0
  %57 = vmatpush1.msra.mxu0 0.0
  %58 = vmatprep.subr.mxu0 0.0
  %59 = vmatpush1.msra.mxu0 0.0
  %60 = vmatprep.subr.mxu0 0.0
  %61 = vmatpush1.msra.mxu0 0.0
  %62 = vmatprep.subr.mxu0 0.0
  %63 = vmatpush1.msra.mxu0 0.0
  %64 = vmatprep.subr.mxu0 0.0
  %65 = vmatpush1.msra.mxu0 0.0
  %66 = vmatprep.subr.mxu0 0.0
  %67 = vmatpush1.msra.mxu0 0.0
  %68 = vmatprep.subr.mxu0 0.0
  %69 = vmatpush1.msra.mxu0 0.0
  %70 = vmatprep.subr.mxu0 0.0
  %71 = vmatpush1.msra.mxu0 0.0
  %72 = vmatprep.subr.mxu0 0.0
  %73 = vmatpush1.msra.mxu0 0.0
  %74 = vmatprep.subr.mxu0 0.0
  %75 = vmatpush1.msra.mxu0 0.0
  %76 = vmatprep.subr.mxu0 0.0
  %77 = vmatpush1.msra.mxu0 0.0
  %78 = vmatprep.subr.mxu0 0.0
  %79 = vmatpush1.msra.mxu0 0.0
  %80 = vmatprep.subr.mxu0 0.0
  %81 = vmatpush1.msra.mxu0 0.0
  %82 = vmatprep.subr.mxu0 0.0
  %83 = vmatpush1.msra.mxu0 0.0
  %84 = vmatprep.subr.mxu0 0.0
  %85 = vmatpush1.msra.mxu0 0.0
  %86 = vmatprep.subr.mxu0 0.0
  %87 = vmatpush1.msra.mxu0 0.0
  %88 = vmatprep.subr.mxu0 0.0
  %89 = vmatpush1.msra.mxu0 0.0
  %90 = vmatprep.subr.mxu0 0.0
  %91 = vmatpush1.msra.mxu0 0.0
  %92 = vmatprep.subr.mxu0 0.0
  %93 = vmatpush1.msra.mxu0 0.0
  %94 = vmatprep.subr.mxu0 0.0
  %95 = vmatpush1.msra.mxu0 0.0
  %96 = vmatprep.subr.mxu0 0.0
  %97 = vmatpush1.msra.mxu0 0.0
  %98 = vmatprep.subr.mxu0 0.0
  %99 = vmatpush1.msra.mxu0 0.0
  %100 = vmatprep.subr.mxu0 0.0
  %101 = vmatpush1.msra.mxu0 0.0
  %102 = vmatprep.mubr.f32.mxu0 0.0
  %v103 = vand.u32 %v31, 4294901760
  %v104 = vsub.f32 %v31, %v103
  %v105 = vand.u32 %v104, 4294901760
  %v106 = vsub.f32 %v104, %v105
  %v107 = vand.u32 %v106, 4294901760
  %108 = vmatmul.mubr.f32.gmra.mrb[0].mxu0 %v107
  %v109 = vpop.f32.mrb[0].mxu0
  %v110 = vadd.f32 %v27, %v109
  %v111 = vpop.f32.mrb[0].mxu0
  %112 = vdwg.mxu0
  %113 = vmatprep.subr.mxu0 0.0
  %v114 = vand.u32 %v35, 4294901760
  %v115 = vsub.f32 %v35, %v114
  %v116 = vand.u32 %v115, 4294901760
  %v117 = vsub.f32 %v115, %v116
  %v118 = vand.u32 %v117, 4294901760
  %119 = vmatpush1.msra.mxu0 %v118
  %120 = vmatprep.subr.mxu0 0.0
  %121 = vmatpush1.msra.mxu0 0.0
  %122 = vmatprep.subr.mxu0 0.0
  %123 = vmatpush1.msra.mxu0 0.0
  %124 = vmatprep.subr.mxu0 0.0
  %125 = vmatpush1.msra.mxu0 0.0
  %126 = vmatprep.subr.mxu0 0.0
  %127 = vmatpush1.msra.mxu0 0.0
  %128 = vmatprep.subr.mxu0 0.0
  %129 = vmatpush1.msra.mxu0 0.0
  %130 = vmatprep.subr.mxu0 0.0
  %131 = vmatpush1.msra.mxu0 0.0
  %132 = vmatprep.subr.mxu0 0.0
  %133 = vmatpush1.msra.mxu0 0.0
  %134 = vmatprep.subr.mxu0 0.0
  %135 = vmatpush1.msra.mxu0 0.0
  %136 = vmatprep.subr.mxu0 0.0
  %137 = vmatpush1.msra.mxu0 0.0
  %138 = vmatprep.subr.mxu0 0.0
  %139 = vmatpush1.msra.mxu0 0.0
  %140 = vmatprep.subr.mxu0 0.0
  %141 = vmatpush1.msra.mxu0 0.0
  %142 = vmatprep.subr.mxu0 0.0
  %143 = vmatpush1.msra.mxu0 0.0
  %144 = vmatprep.subr.mxu0 0.0
  %145 = vmatpush1.msra.mxu0 0.0
  %146 = vmatprep.subr.mxu0 0.0
  %147 = vmatpush1.msra.mxu0 0.0
  %148 = vmatprep.subr.mxu0 0.0
  %149 = vmatpush1.msra.mxu0 0.0
  %150 = vmatprep.subr.mxu0 0.0
  %151 = vmatpush1.msra.mxu0 0.0
  %152 = vmatprep.subr.mxu0 0.0
  %153 = vmatpush1.msra.mxu0 0.0
  %154 = vmatprep.subr.mxu0 0.0
  %155 = vmatpush1.msra.mxu0 0.0
  %156 = vmatprep.subr.mxu0 0.0
  %157 = vmatpush1.msra.mxu0 0.0
  %158 = vmatprep.subr.mxu0 0.0
  %159 = vmatpush1.msra.mxu0 0.0
  %160 = vmatprep.subr.mxu0 0.0
  %161 = vmatpush1.msra.mxu0 0.0
  %162 = vmatprep.subr.mxu0 0.0
  %163 = vmatpush1.msra.mxu0 0.0
  %164 = vmatprep.subr.mxu0 0.0
  %165 = vmatpush1.msra.mxu0 0.0
  %166 = vmatprep.subr.mxu0 0.0
  %167 = vmatpush1.msra.mxu0 0.0
  %168 = vmatprep.subr.mxu0 0.0
  %169 = vmatpush1.msra.mxu0 0.0
  %170 = vmatprep.subr.mxu0 0.0
  %171 = vmatpush1.msra.mxu0 0.0
  %172 = vmatprep.subr.mxu0 0.0
  %173 = vmatpush1.msra.mxu0 0.0
  %174 = vmatprep.subr.mxu0 0.0
  %175 = vmatpush1.msra.mxu0 0.0
  %176 = vmatprep.subr.mxu0 0.0
  %177 = vmatpush1.msra.mxu0 0.0
  %178 = vmatprep.subr.mxu0 0.0
  %179 = vmatpush1.msra.mxu0 0.0
  %180 = vmatprep.subr.mxu0 0.0
  %181 = vmatpush1.msra.mxu0 0.0
  %182 = vmatprep.mubr.f32.mxu0 0.0
  %v183 = vand.u32 %v31, 4294901760
  %184 = vmatmul.mubr.f32.gmra.mrb[0].mxu0 %v183
  %v185 = vpop.f32.mrb[0].mxu0
  %v186 = vadd.f32 %v110, %v185
  %v187 = vpop.f32.mrb[0].mxu0
  %188 = vdwg.mxu0
  %189 = vmatprep.subr.mxu0 0.0
  %v190 = vand.u32 %v35, 4294901760
  %v191 = vsub.f32 %v35, %v190
  %192 = vmatpush1.msra.mxu0 %v191
  %193 = vmatprep.subr.mxu0 0.0
  %194 = vmatpush1.msra.mxu0 0.0
  %195 = vmatprep.subr.mxu0 0.0
  %196 = vmatpush1.msra.mxu0 0.0
  %197 = vmatprep.subr.mxu0 0.0
  %198 = vmatpush1.msra.mxu0 0.0
  %199 = vmatprep.subr.mxu0 0.0
  %200 = vmatpush1.msra.mxu0 0.0
  %201 = vmatprep.subr.mxu0 0.0
  %202 = vmatpush1.msra.mxu0 0.0
  %203 = vmatprep.subr.mxu0 0.0
  %204 = vmatpush1.msra.mxu0 0.0
  %205 = vmatprep.subr.mxu0 0.0
  %206 = vmatpush1.msra.mxu0 0.0
  %207 = vmatprep.subr.mxu0 0.0
  %208 = vmatpush1.msra.mxu0 0.0
  %209 = vmatprep.subr.mxu0 0.0
  %210 = vmatpush1.msra.mxu0 0.0
  %211 = vmatprep.subr.mxu0 0.0
  %212 = vmatpush1.msra.mxu0 0.0
  %213 = vmatprep.subr.mxu0 0.0
  %214 = vmatpush1.msra.mxu0 0.0
  %215 = vmatprep.subr.mxu0 0.0
  %216 = vmatpush1.msra.mxu0 0.0
  %217 = vmatprep.subr.mxu0 0.0
  %218 = vmatpush1.msra.mxu0 0.0
  %219 = vmatprep.subr.mxu0 0.0
  %220 = vmatpush1.msra.mxu0 0.0
  %221 = vmatprep.subr.mxu0 0.0
  %222 = vmatpush1.msra.mxu0 0.0
  %223 = vmatprep.subr.mxu0 0.0
  %224 = vmatpush1.msra.mxu0 0.0
  %225 = vmatprep.subr.mxu0 0.0
  %226 = vmatpush1.msra.mxu0 0.0
  %227 = vmatprep.subr.mxu0 0.0
  %228 = vmatpush1.msra.mxu0 0.0
  %229 = vmatprep.subr.mxu0 0.0
  %230 = vmatpush1.msra.mxu0 0.0
  %231 = vmatprep.subr.mxu0 0.0
  %232 = vmatpush1.msra.mxu0 0.0
  %233 = vmatprep.subr.mxu0 0.0
  %234 = vmatpush1.msra.mxu0 0.0
  %235 = vmatprep.subr.mxu0 0.0
  %236 = vmatpush1.msra.mxu0 0.0
  %237 = vmatprep.subr.mxu0 0.0
  %238 = vmatpush1.msra.mxu0 0.0
  %239 = vmatprep.subr.mxu0 0.0
  %240 = vmatpush1.msra.mxu0 0.0
  %241 = vmatprep.subr.mxu0 0.0
  %242 = vmatpush1.msra.mxu0 0.0
  %243 = vmatprep.subr.mxu0 0.0
  %244 = vmatpush1.msra.mxu0 0.0
  %245 = vmatprep.subr.mxu0 0.0
  %246 = vmatpush1.msra.mxu0 0.0
  %247 = vmatprep.subr.mxu0 0.0
  %248 = vmatpush1.msra.mxu0 0.0
  %249 = vmatprep.subr.mxu0 0.0
  %250 = vmatpush1.msra.mxu0 0.0
  %251 = vmatprep.subr.mxu0 0.0
  %252 = vmatpush1.msra.mxu0 0.0
  %253 = vmatprep.subr.mxu0 0.0
  %254 = vmatpush1.msra.mxu0 0.0
  %255 = vmatprep.mubr.f32.mxu0 0.0
  %v256 = vand.u32 %v31, 4294901760
  %v257 = vsub.f32 %v31, %v256
  %258 = vmatmul.mubr.f32.gmra.mrb[0].mxu0 %v257
  %v259 = vpop.f32.mrb[0].mxu0
  %v260 = vadd.f32 %v186, %v259
  %v261 = vpop.f32.mrb[0].mxu0
  %262 = vdwg.mxu0
  %263 = vmatprep.subr.mxu0 0.0
  %v264 = vand.u32 %v35, 4294901760
  %265 = vmatpush1.msra.mxu0 %v264
  %266 = vmatprep.subr.mxu0 0.0
  %267 = vmatpush1.msra.mxu0 0.0
  %268 = vmatprep.subr.mxu0 0.0
  %269 = vmatpush1.msra.mxu0 0.0
  %270 = vmatprep.subr.mxu0 0.0
  %271 = vmatpush1.msra.mxu0 0.0
  %272 = vmatprep.subr.mxu0 0.0
  %273 = vmatpush1.msra.mxu0 0.0
  %274 = vmatprep.subr.mxu0 0.0
  %275 = vmatpush1.msra.mxu0 0.0
  %276 = vmatprep.subr.mxu0 0.0
  %277 = vmatpush1.msra.mxu0 0.0
  %278 = vmatprep.subr.mxu0 0.0
  %279 = vmatpush1.msra.mxu0 0.0
  %280 = vmatprep.subr.mxu0 0.0
  %281 = vmatpush1.msra.mxu0 0.0
  %282 = vmatprep.subr.mxu0 0.0
  %283 = vmatpush1.msra.mxu0 0.0
  %284 = vmatprep.subr.mxu0 0.0
  %285 = vmatpush1.msra.mxu0 0.0
  %286 = vmatprep.subr.mxu0 0.0
  %287 = vmatpush1.msra.mxu0 0.0
  %288 = vmatprep.subr.mxu0 0.0
  %289 = vmatpush1.msra.mxu0 0.0
  %290 = vmatprep.subr.mxu0 0.0
  %291 = vmatpush1.msra.mxu0 0.0
  %292 = vmatprep.subr.mxu0 0.0
  %293 = vmatpush1.msra.mxu0 0.0
  %294 = vmatprep.subr.mxu0 0.0
  %295 = vmatpush1.msra.mxu0 0.0
  %296 = vmatprep.subr.mxu0 0.0
  %297 = vmatpush1.msra.mxu0 0.0
  %298 = vmatprep.subr.mxu0 0.0
  %299 = vmatpush1.msra.mxu0 0.0
  %300 = vmatprep.subr.mxu0 0.0
  %301 = vmatpush1.msra.mxu0 0.0
  %302 = vmatprep.subr.mxu0 0.0
  %303 = vmatpush1.msra.mxu0 0.0
  %304 = vmatprep.subr.mxu0 0.0
  %305 = vmatpush1.msra.mxu0 0.0
  %306 = vmatprep.subr.mxu0 0.0
  %307 = vmatpush1.msra.mxu0 0.0
  %308 = vmatprep.subr.mxu0 0.0
  %309 = vmatpush1.msra.mxu0 0.0
  %310 = vmatprep.subr.mxu0 0.0
  %311 = vmatpush1.msra.mxu0 0.0
  %312 = vmatprep.subr.mxu0 0.0
  %313 = vmatpush1.msra.mxu0 0.0
  %314 = vmatprep.subr.mxu0 0.0
  %315 = vmatpush1.msra.mxu0 0.0
  %316 = vmatprep.subr.mxu0 0.0
  %317 = vmatpush1.msra.mxu0 0.0
  %318 = vmatprep.subr.mxu0 0.0
  %319 = vmatpush1.msra.mxu0 0.0
  %320 = vmatprep.subr.mxu0 0.0
  %321 = vmatpush1.msra.mxu0 0.0
  %322 = vmatprep.subr.mxu0 0.0
  %323 = vmatpush1.msra.mxu0 0.0
  %324 = vmatprep.subr.mxu0 0.0
  %325 = vmatpush1.msra.mxu0 0.0
  %326 = vmatprep.subr.mxu0 0.0
  %327 = vmatpush1.msra.mxu0 0.0
  %328 = vmatprep.mubr.f32.mxu0 0.0
  %v329 = vand.u32 %v31, 4294901760
  %v330 = vsub.f32 %v31, %v329
  %v331 = vand.u32 %v330, 4294901760
  %332 = vmatmul.mubr.f32.gmra.mrb[0].mxu0 %v331
  %v333 = vpop.f32.mrb[0].mxu0
  %v334 = vadd.f32 %v260, %v333
  %v335 = vpop.f32.mrb[0].mxu0
  %336 = vdwg.mxu0
  %337 = vmatprep.subr.mxu0 0.0
  %v338 = vand.u32 %v35, 4294901760
  %v339 = vsub.f32 %v35, %v338
  %v340 = vand.u32 %v339, 4294901760
  %341 = vmatpush1.msra.mxu0 %v340
  %342 = vmatprep.subr.mxu0 0.0
  %343 = vmatpush1.msra.mxu0 0.0
  %344 = vmatprep.subr.mxu0 0.0
  %345 = vmatpush1.msra.mxu0 0.0
  %346 = vmatprep.subr.mxu0 0.0
  %347 = vmatpush1.msra.mxu0 0.0
  %348 = vmatprep.subr.mxu0 0.0
  %349 = vmatpush1.msra.mxu0 0.0
  %350 = vmatprep.subr.mxu0 0.0
  %351 = vmatpush1.msra.mxu0 0.0
  %352 = vmatprep.subr.mxu0 0.0
  %353 = vmatpush1.msra.mxu0 0.0
  %354 = vmatprep.subr.mxu0 0.0
  %355 = vmatpush1.msra.mxu0 0.0
  %356 = vmatprep.subr.mxu0 0.0
  %357 = vmatpush1.msra.mxu0 0.0
  %358 = vmatprep.subr.mxu0 0.0
  %359 = vmatpush1.msra.mxu0 0.0
  %360 = vmatprep.subr.mxu0 0.0
  %361 = vmatpush1.msra.mxu0 0.0
  %362 = vmatprep.subr.mxu0 0.0
  %363 = vmatpush1.msra.mxu0 0.0
  %364 = vmatprep.subr.mxu0 0.0
  %365 = vmatpush1.msra.mxu0 0.0
  %366 = vmatprep.subr.mxu0 0.0
  %367 = vmatpush1.msra.mxu0 0.0
  %368 = vmatprep.subr.mxu0 0.0
  %369 = vmatpush1.msra.mxu0 0.0
  %370 = vmatprep.subr.mxu0 0.0
  %371 = vmatpush1.msra.mxu0 0.0
  %372 = vmatprep.subr.mxu0 0.0
  %373 = vmatpush1.msra.mxu0 0.0
  %374 = vmatprep.subr.mxu0 0.0
  %375 = vmatpush1.msra.mxu0 0.0
  %376 = vmatprep.subr.mxu0 0.0
  %377 = vmatpush1.msra.mxu0 0.0
  %378 = vmatprep.subr.mxu0 0.0
  %379 = vmatpush1.msra.mxu0 0.0
  %380 = vmatprep.subr.mxu0 0.0
  %381 = vmatpush1.msra.mxu0 0.0
  %382 = vmatprep.subr.mxu0 0.0
  %383 = vmatpush1.msra.mxu0 0.0
  %384 = vmatprep.subr.mxu0 0.0
  %385 = vmatpush1.msra.mxu0 0.0
  %386 = vmatprep.subr.mxu0 0.0
  %387 = vmatpush1.msra.mxu0 0.0
  %388 = vmatprep.subr.mxu0 0.0
  %389 = vmatpush1.msra.mxu0 0.0
  %390 = vmatprep.subr.mxu0 0.0
  %391 = vmatpush1.msra.mxu0 0.0
  %392 = vmatprep.subr.mxu0 0.0
  %393 = vmatpush1.msra.mxu0 0.0
  %394 = vmatprep.subr.mxu0 0.0
  %395 = vmatpush1.msra.mxu0 0.0
  %396 = vmatprep.subr.mxu0 0.0
  %397 = vmatpush1.msra.mxu0 0.0
  %398 = vmatprep.subr.mxu0 0.0
  %399 = vmatpush1.msra.mxu0 0.0
  %400 = vmatprep.subr.mxu0 0.0
  %401 = vmatpush1.msra.mxu0 0.0
  %402 = vmatprep.subr.mxu0 0.0
  %403 = vmatpush1.msra.mxu0 0.0
  %404 = vmatprep.mubr.f32.mxu0 0.0
  %v405 = vand.u32 %v31, 4294901760
  %406 = vmatmul.mubr.f32.gmra.mrb[0].mxu0 %v405
  %v407 = vpop.f32.mrb[0].mxu0
  %v408 = vadd.f32 %v334, %v407
  %v409 = vpop.f32.mrb[0].mxu0
  %410 = vdwg.mxu0
  %411 = vmatprep.subr.mxu0 0.0
  %v412 = vand.u32 %v35, 4294901760
  %413 = vmatpush1.msra.mxu0 %v412
  %414 = vmatprep.subr.mxu0 0.0
  %415 = vmatpush1.msra.mxu0 0.0
  %416 = vmatprep.subr.mxu0 0.0
  %417 = vmatpush1.msra.mxu0 0.0
  %418 = vmatprep.subr.mxu0 0.0
  %419 = vmatpush1.msra.mxu0 0.0
  %420 = vmatprep.subr.mxu0 0.0
  %421 = vmatpush1.msra.mxu0 0.0
  %422 = vmatprep.subr.mxu0 0.0
  %423 = vmatpush1.msra.mxu0 0.0
  %424 = vmatprep.subr.mxu0 0.0
  %425 = vmatpush1.msra.mxu0 0.0
  %426 = vmatprep.subr.mxu0 0.0
  %427 = vmatpush1.msra.mxu0 0.0
  %428 = vmatprep.subr.mxu0 0.0
  %429 = vmatpush1.msra.mxu0 0.0
  %430 = vmatprep.subr.mxu0 0.0
  %431 = vmatpush1.msra.mxu0 0.0
  %432 = vmatprep.subr.mxu0 0.0
  %433 = vmatpush1.msra.mxu0 0.0
  %434 = vmatprep.subr.mxu0 0.0
  %435 = vmatpush1.msra.mxu0 0.0
  %436 = vmatprep.subr.mxu0 0.0
  %437 = vmatpush1.msra.mxu0 0.0
  %438 = vmatprep.subr.mxu0 0.0
  %439 = vmatpush1.msra.mxu0 0.0
  %440 = vmatprep.subr.mxu0 0.0
  %441 = vmatpush1.msra.mxu0 0.0
  %442 = vmatprep.subr.mxu0 0.0
  %443 = vmatpush1.msra.mxu0 0.0
  %444 = vmatprep.subr.mxu0 0.0
  %445 = vmatpush1.msra.mxu0 0.0
  %446 = vmatprep.subr.mxu0 0.0
  %447 = vmatpush1.msra.mxu0 0.0
  %448 = vmatprep.subr.mxu0 0.0
  %449 = vmatpush1.msra.mxu0 0.0
  %450 = vmatprep.subr.mxu0 0.0
  %451 = vmatpush1.msra.mxu0 0.0
  %452 = vmatprep.subr.mxu0 0.0
  %453 = vmatpush1.msra.mxu0 0.0
  %454 = vmatprep.subr.mxu0 0.0
  %455 = vmatpush1.msra.mxu0 0.0
  %456 = vmatprep.subr.mxu0 0.0
  %457 = vmatpush1.msra.mxu0 0.0
  %458 = vmatprep.subr.mxu0 0.0
  %459 = vmatpush1.msra.mxu0 0.0
  %460 = vmatprep.subr.mxu0 0.0
  %461 = vmatpush1.msra.mxu0 0.0
  %462 = vmatprep.subr.mxu0 0.0
  %463 = vmatpush1.msra.mxu0 0.0
  %464 = vmatprep.subr.mxu0 0.0
  %465 = vmatpush1.msra.mxu0 0.0
  %466 = vmatprep.subr.mxu0 0.0
  %467 = vmatpush1.msra.mxu0 0.0
  %468 = vmatprep.subr.mxu0 0.0
  %469 = vmatpush1.msra.mxu0 0.0
  %470 = vmatprep.subr.mxu0 0.0
  %471 = vmatpush1.msra.mxu0 0.0
  %472 = vmatprep.subr.mxu0 0.0
  %473 = vmatpush1.msra.mxu0 0.0
  %474 = vmatprep.subr.mxu0 0.0
  %475 = vmatpush1.msra.mxu0 0.0
  %476 = vmatprep.mubr.f32.mxu0 0.0
  %v477 = vand.u32 %v31, 4294901760
  %478 = vmatmul.mubr.f32.gmra.mrb[0].mxu0 %v477
  %v479 = vpop.f32.mrb[0].mxu0
  %v480 = vadd.f32 %v408, %v479
  %v481 = vpop.f32.mrb[0].mxu0
  %482 = vdwg.mxu0
  %v483 = vmax.f32 %v480, 0.0
  %v484 = vld [vmem:[%s3] sm:$0xff]
  %v485 = vld [vmem:[%s3 + $0x8] sm:$0xff]
  %v486 = vld [vmem:[%s3 + $0x10] sm:$0xff]
  %v487 = vld [vmem:[%s3 + $0x18] sm:$0xff]
  %v488 = vld [vmem:[%s3 + $0x20] sm:$0xff]
  %v489 = vld [vmem:[%s3 + $0x28] sm:$0xff]
  %v490 = vld [vmem:[%s3 + $0x30] sm:$0xff]
  %v491 = vld [vmem:[%s3 + $0x38] sm:$0xff]
  %v492 = vld [vmem:[%s4] sm:$0x1]
  %v494 = vlaneseq
  %v495 = vshrl.u32 %v494, 7
  %v496 = vsub.s32 0, %v495
  %v497 = vrot.slane %v492, %v496
  %vm499 = vcmask 523264
  %v501 = vsel %vm499, %v483, 0
  %503 = vmatprep.subr.mxu0 0.0
  %v504 = vand.u32 %v484, 4294901760
  %505 = vmatpush1.msra.mxu0 %v504
  %506 = vmatprep.subr.mxu0 0.0
  %v507 = vand.u32 %v485, 4294901760
  %508 = vmatpush1.msra.mxu0 %v507
  %509 = vmatprep.subr.mxu0 0.0
  %v510 = vand.u32 %v486, 4294901760
  %511 = vmatpush1.msra.mxu0 %v510
  %512 = vmatprep.subr.mxu0 0.0
  %v513 = vand.u32 %v487, 4294901760
  %514 = vmatpush1.msra.mxu0 %v513
  %515 = vmatprep.subr.mxu0 0.0
  %v516 = vand.u32 %v488, 4294901760
  %517 = vmatpush1.msra.mxu0 %v516
  %518 = vmatprep.subr.mxu0 0.0
  %v519 = vand.u32 %v489, 4294901760
  %520 = vmatpush1.msra.mxu0 %v519
  %521 = vmatprep.subr.mxu0 0.0
  %v522 = vand.u32 %v490, 4294901760
  %523 = vmatpush1.msra.mxu0 %v522
  %524 = vmatprep.subr.mxu0 0.0
  %v525 = vand.u32 %v491, 4294901760
  %526 = vmatpush1.msra.mxu0 %v525
  %527 = vmatprep.subr.mxu0 0.0
  %528 = vmatpush1.msra.mxu0 0.0
  %529 = vmatprep.subr.mxu0 0.0
  %530 = vmatpush1.msra.mxu0 0.0
  %531 = vmatprep.subr.mxu0 0.0
  %532 = vmatpush1.msra.mxu0 0.0
  %533 = vmatprep.subr.mxu0 0.0
  %534 = vmatpush1.msra.mxu0 0.0
  %535 = vmatprep.subr.mxu0 0.0
  %536 = vmatpush1.msra.mxu0 0.0
  %537 = vmatprep.subr.mxu0 0.0
  %538 = vmatpush1.msra.mxu0 0.0
  %539 = vmatprep.subr.mxu0 0.0
  %540 = vmatpush1.msra.mxu0 0.0
  %541 = vmatprep.subr.mxu0 0.0
  %542 = vmatpush1.msra.mxu0 0.0
  %543 = vmatprep.subr.mxu0 0.0
  %544 = vmatpush1.msra.mxu0 0.0
  %545 = vmatprep.subr.mxu0 0.0
  %546 = vmatpush1.msra.mxu0 0.0
  %547 = vmatprep.subr.mxu0 0.0
  %548 = vmatpush1.msra.mxu0 0.0
  %549 = vmatprep.subr.mxu0 0.0
  %550 = vmatpush1.msra.mxu0 0.0
  %551 = vmatprep.subr.mxu0 0.0
  %552 = vmatpush1.msra.mxu0 0.0
  %553 = vmatprep.subr.mxu0 0.0
  %554 = vmatpush1.msra.mxu0 0.0
  %555 = vmatprep.subr.mxu0 0.0
  %556 = vmatpush1.msra.mxu0 0.0
  %557 = vmatprep.subr.mxu0 0.0
  %558 = vmatpush1.msra.mxu0 0.0
  %559 = vmatprep.subr.mxu0 0.0
  %560 = vmatpush1.msra.mxu0 0.0
  %561 = vmatprep.subr.mxu0 0.0
  %562 = vmatpush1.msra.mxu0 0.0
  %563 = vmatprep.subr.mxu0 0.0
  %564 = vmatpush1.msra.mxu0 0.0
  %565 = vmatprep.subr.mxu0 0.0
  %566 = vmatpush1.msra.mxu0 0.0
  %567 = vmatprep.subr.mxu0 0.0
  %568 = vmatpush1.msra.mxu0 0.0
  %569 = vmatprep.subr.mxu0 0.0
  %570 = vmatpush1.msra.mxu0 0.0
  %571 = vmatprep.subr.mxu0 0.0
  %572 = vmatpush1.msra.mxu0 0.0
  %573 = vmatprep.subr.mxu0 0.0
  %574 = vmatpush1.msra.mxu0 0.0
  %575 = vmatprep.mubr.f32.mxu0 0.0
  %v576 = vand.u32 %v501, 4294901760
  %v577 = vsub.f32 %v501, %v576
  %v578 = vand.u32 %v577, 4294901760
  %v579 = vsub.f32 %v577, %v578
  %v580 = vand.u32 %v579, 4294901760
  %581 = vmatmul.mubr.f32.gmra.mrb[0].mxu0 %v580
  %v582 = vpop.f32.mrb[0].mxu0
  %v583 = vadd.f32 %v497, %v582
  %v584 = vpop.f32.mrb[0].mxu0
  %585 = vdwg.mxu0
  %586 = vmatprep.subr.mxu0 0.0
  %v587 = vand.u32 %v484, 4294901760
  %v588 = vsub.f32 %v484, %v587
  %v589 = vand.u32 %v588, 4294901760
  %v590 = vsub.f32 %v588, %v589
  %v591 = vand.u32 %v590, 4294901760
  %592 = vmatpush1.msra.mxu0 %v591
  %593 = vmatprep.subr.mxu0 0.0
  %v594 = vand.u32 %v485, 4294901760
  %v595 = vsub.f32 %v485, %v594
  %v596 = vand.u32 %v595, 4294901760
  %v597 = vsub.f32 %v595, %v596
  %v598 = vand.u32 %v597, 4294901760
  %599 = vmatpush1.msra.mxu0 %v598
  %600 = vmatprep.subr.mxu0 0.0
  %v601 = vand.u32 %v486, 4294901760
  %v602 = vsub.f32 %v486, %v601
  %v603 = vand.u32 %v602, 4294901760
  %v604 = vsub.f32 %v602, %v603
  %v605 = vand.u32 %v604, 4294901760
  %606 = vmatpush1.msra.mxu0 %v605
  %607 = vmatprep.subr.mxu0 0.0
  %v608 = vand.u32 %v487, 4294901760
  %v609 = vsub.f32 %v487, %v608
  %v610 = vand.u32 %v609, 4294901760
  %v611 = vsub.f32 %v609, %v610
  %v612 = vand.u32 %v611, 4294901760
  %613 = vmatpush1.msra.mxu0 %v612
  %614 = vmatprep.subr.mxu0 0.0
  %v615 = vand.u32 %v488, 4294901760
  %v616 = vsub.f32 %v488, %v615
  %v617 = vand.u32 %v616, 4294901760
  %v618 = vsub.f32 %v616, %v617
  %v619 = vand.u32 %v618, 4294901760
  %620 = vmatpush1.msra.mxu0 %v619
  %621 = vmatprep.subr.mxu0 0.0
  %v622 = vand.u32 %v489, 4294901760
  %v623 = vsub.f32 %v489, %v622
  %v624 = vand.u32 %v623, 4294901760
  %v625 = vsub.f32 %v623, %v624
  %v626 = vand.u32 %v625, 4294901760
  %627 = vmatpush1.msra.mxu0 %v626
  %628 = vmatprep.subr.mxu0 0.0
  %v629 = vand.u32 %v490, 4294901760
  %v630 = vsub.f32 %v490, %v629
  %v631 = vand.u32 %v630, 4294901760
  %v632 = vsub.f32 %v630, %v631
  %v633 = vand.u32 %v632, 4294901760
  %634 = vmatpush1.msra.mxu0 %v633
  %635 = vmatprep.subr.mxu0 0.0
  %v636 = vand.u32 %v491, 4294901760
  %v637 = vsub.f32 %v491, %v636
  %v638 = vand.u32 %v637, 4294901760
  %v639 = vsub.f32 %v637, %v638
  %v640 = vand.u32 %v639, 4294901760
  %641 = vmatpush1.msra.mxu0 %v640
  %642 = vmatprep.subr.mxu0 0.0
  %643 = vmatpush1.msra.mxu0 0.0
  %644 = vmatprep.subr.mxu0 0.0
  %645 = vmatpush1.msra.mxu0 0.0
  %646 = vmatprep.subr.mxu0 0.0
  %647 = vmatpush1.msra.mxu0 0.0
  %648 = vmatprep.subr.mxu0 0.0
  %649 = vmatpush1.msra.mxu0 0.0
  %650 = vmatprep.subr.mxu0 0.0
  %651 = vmatpush1.msra.mxu0 0.0
  %652 = vmatprep.subr.mxu0 0.0
  %653 = vmatpush1.msra.mxu0 0.0
  %654 = vmatprep.subr.mxu0 0.0
  %655 = vmatpush1.msra.mxu0 0.0
  %656 = vmatprep.subr.mxu0 0.0
  %657 = vmatpush1.msra.mxu0 0.0
  %658 = vmatprep.subr.mxu0 0.0
  %659 = vmatpush1.msra.mxu0 0.0
  %660 = vmatprep.subr.mxu0 0.0
  %661 = vmatpush1.msra.mxu0 0.0
  %662 = vmatprep.subr.mxu0 0.0
  %663 = vmatpush1.msra.mxu0 0.0
  %664 = vmatprep.subr.mxu0 0.0
  %665 = vmatpush1.msra.mxu0 0.0
  %666 = vmatprep.subr.mxu0 0.0
  %667 = vmatpush1.msra.mxu0 0.0
  %668 = vmatprep.subr.mxu0 0.0
  %669 = vmatpush1.msra.mxu0 0.0
  %670 = vmatprep.subr.mxu0 0.0
  %671 = vmatpush1.msra.mxu0 0.0
  %672 = vmatprep.subr.mxu0 0.0
  %673 = vmatpush1.msra.mxu0 0.0
  %674 = vmatprep.subr.mxu0 0.0
  %675 = vmatpush1.msra.mxu0 0.0
  %676 = vmatprep.subr.mxu0 0.0
  %677 = vmatpush1.msra.mxu0 0.0
  %678 = vmatprep.subr.mxu0 0.0
  %679 = vmatpush1.msra.mxu0 0.0
  %680 = vmatprep.subr.mxu0 0.0
  %681 = vmatpush1.msra.mxu0 0.0
  %682 = vmatprep.subr.mxu0 0.0
  %683 = vmatpush1.msra.mxu0 0.0
  %684 = vmatprep.subr.mxu0 0.0
  %685 = vmatpush1.msra.mxu0 0.0
  %686 = vmatprep.subr.mxu0 0.0
  %687 = vmatpush1.msra.mxu0 0.0
  %688 = vmatprep.subr.mxu0 0.0
  %689 = vmatpush1.msra.mxu0 0.0
  %690 = vmatprep.mubr.f32.mxu0 0.0
  %v691 = vand.u32 %v501, 4294901760
  %692 = vmatmul.mubr.f32.gmra.mrb[0].mxu0 %v691
  %v693 = vpop.f32.mrb[0].mxu0
  %v694 = vadd.f32 %v583, %v693
  %v695 = vpop.f32.mrb[0].mxu0
  %696 = vdwg.mxu0
  %697 = vmatprep.subr.mxu0 0.0
  %v698 = vand.u32 %v484, 4294901760
  %v699 = vsub.f32 %v484, %v698
  %700 = vmatpush1.msra.mxu0 %v699
  %701 = vmatprep.subr.mxu0 0.0
  %v702 = vand.u32 %v485, 4294901760
  %v703 = vsub.f32 %v485, %v702
  %704 = vmatpush1.msra.mxu0 %v703
  %705 = vmatprep.subr.mxu0 0.0
  %v706 = vand.u32 %v486, 4294901760
  %v707 = vsub.f32 %v486, %v706
  %708 = vmatpush1.msra.mxu0 %v707
  %709 = vmatprep.subr.mxu0 0.0
  %v710 = vand.u32 %v487, 4294901760
  %v711 = vsub.f32 %v487, %v710
  %712 = vmatpush1.msra.mxu0 %v711
  %713 = vmatprep.subr.mxu0 0.0
  %v714 = vand.u32 %v488, 4294901760
  %v715 = vsub.f32 %v488, %v714
  %716 = vmatpush1.msra.mxu0 %v715
  %717 = vmatprep.subr.mxu0 0.0
  %v718 = vand.u32 %v489, 4294901760
  %v719 = vsub.f32 %v489, %v718
  %720 = vmatpush1.msra.mxu0 %v719
  %721 = vmatprep.subr.mxu0 0.0
  %v722 = vand.u32 %v490, 4294901760
  %v723 = vsub.f32 %v490, %v722
  %724 = vmatpush1.msra.mxu0 %v723
  %725 = vmatprep.subr.mxu0 0.0
  %v726 = vand.u32 %v491, 4294901760
  %v727 = vsub.f32 %v491, %v726
  %728 = vmatpush1.msra.mxu0 %v727
  %729 = vmatprep.subr.mxu0 0.0
  %730 = vmatpush1.msra.mxu0 0.0
  %731 = vmatprep.subr.mxu0 0.0
  %732 = vmatpush1.msra.mxu0 0.0
  %733 = vmatprep.subr.mxu0 0.0
  %734 = vmatpush1.msra.mxu0 0.0
  %735 = vmatprep.subr.mxu0 0.0
  %736 = vmatpush1.msra.mxu0 0.0
  %737 = vmatprep.subr.mxu0 0.0
  %738 = vmatpush1.msra.mxu0 0.0
  %739 = vmatprep.subr.mxu0 0.0
  %740 = vmatpush1.msra.mxu0 0.0
  %741 = vmatprep.subr.mxu0 0.0
  %742 = vmatpush1.msra.mxu0 0.0
  %743 = vmatprep.subr.mxu0 0.0
  %744 = vmatpush1.msra.mxu0 0.0
  %745 = vmatprep.subr.mxu0 0.0
  %746 = vmatpush1.msra.mxu0 0.0
  %747 = vmatprep.subr.mxu0 0.0
  %748 = vmatpush1.msra.mxu0 0.0
  %749 = vmatprep.subr.mxu0 0.0
  %750 = vmatpush1.msra.mxu0 0.0
  %751 = vmatprep.subr.mxu0 0.0
  %752 = vmatpush1.msra.mxu0 0.0
  %753 = vmatprep.subr.mxu0 0.0
  %754 = vmatpush1.msra.mxu0 0.0
  %755 = vmatprep.subr.mxu0 0.0
  %756 = vmatpush1.msra.mxu0 0.0
  %757 = vmatprep.subr.mxu0 0.0
  %758 = vmatpush1.msra.mxu0 0.0
  %759 = vmatprep.subr.mxu0 0.0
  %760 = vmatpush1.msra.mxu0 0.0
  %761 = vmatprep.subr.mxu0 0.0
  %762 = vmatpush1.msra.mxu0 0.0
  %763 = vmatprep.subr.mxu0 0.0
  %764 = vmatpush1.msra.mxu0 0.0
  %765 = vmatprep.subr.mxu0 0.0
  %766 = vmatpush1.msra.mxu0 0.0
  %767 = vmatprep.subr.mxu0 0.0
  %768 = vmatpush1.msra.mxu0 0.0
  %769 = vmatprep.subr.mxu0 0.0
  %770 = vmatpush1.msra.mxu0 0.0
  %771 = vmatprep.subr.mxu0 0.0
  %772 = vmatpush1.msra.mxu0 0.0
  %773 = vmatprep.subr.mxu0 0.0
  %774 = vmatpush1.msra.mxu0 0.0
  %775 = vmatprep.subr.mxu0 0.0
  %776 = vmatpush1.msra.mxu0 0.0
  %777 = vmatprep.mubr.f32.mxu0 0.0
  %v778 = vand.u32 %v501, 4294901760
  %v779 = vsub.f32 %v501, %v778
  %780 = vmatmul.mubr.f32.gmra.mrb[0].mxu0 %v779
  %v781 = vpop.f32.mrb[0].mxu0
  %v782 = vadd.f32 %v694, %v781
  %v783 = vpop.f32.mrb[0].mxu0
  %784 = vdwg.mxu0
  %785 = vmatprep.subr.mxu0 0.0
  %v786 = vand.u32 %v484, 4294901760
  %787 = vmatpush1.msra.mxu0 %v786
  %788 = vmatprep.subr.mxu0 0.0
  %v789 = vand.u32 %v485, 4294901760
  %790 = vmatpush1.msra.mxu0 %v789
  %791 = vmatprep.subr.mxu0 0.0
  %v792 = vand.u32 %v486, 4294901760
  %793 = vmatpush1.msra.mxu0 %v792
  %794 = vmatprep.subr.mxu0 0.0
  %v795 = vand.u32 %v487, 4294901760
  %796 = vmatpush1.msra.mxu0 %v795
  %797 = vmatprep.subr.mxu0 0.0
  %v798 = vand.u32 %v488, 4294901760
  %799 = vmatpush1.msra.mxu0 %v798
  %800 = vmatprep.subr.mxu0 0.0
  %v801 = vand.u32 %v489, 4294901760
  %802 = vmatpush1.msra.mxu0 %v801
  %803 = vmatprep.subr.mxu0 0.0
  %v804 = vand.u32 %v490, 4294901760
  %805 = vmatpush1.msra.mxu0 %v804
  %806 = vmatprep.subr.mxu0 0.0
  %v807 = vand.u32 %v491, 4294901760
  %808 = vmatpush1.msra.mxu0 %v807
  %809 = vmatprep.subr.mxu0 0.0
  %810 = vmatpush1.msra.mxu0 0.0
  %811 = vmatprep.subr.mxu0 0.0
  %812 = vmatpush1.msra.mxu0 0.0
  %813 = vmatprep.subr.mxu0 0.0
  %814 = vmatpush1.msra.mxu0 0.0
  %815 = vmatprep.subr.mxu0 0.0
  %816 = vmatpush1.msra.mxu0 0.0
  %817 = vmatprep.subr.mxu0 0.0
  %818 = vmatpush1.msra.mxu0 0.0
  %819 = vmatprep.subr.mxu0 0.0
  %820 = vmatpush1.msra.mxu0 0.0
  %821 = vmatprep.subr.mxu0 0.0
  %822 = vmatpush1.msra.mxu0 0.0
  %823 = vmatprep.subr.mxu0 0.0
  %824 = vmatpush1.msra.mxu0 0.0
  %825 = vmatprep.subr.mxu0 0.0
  %826 = vmatpush1.msra.mxu0 0.0
  %827 = vmatprep.subr.mxu0 0.0
  %828 = vmatpush1.msra.mxu0 0.0
  %829 = vmatprep.subr.mxu0 0.0
  %830 = vmatpush1.msra.mxu0 0.0
  %831 = vmatprep.subr.mxu0 0.0
  %832 = vmatpush1.msra.mxu0 0.0
  %833 = vmatprep.subr.mxu0 0.0
  %834 = vmatpush1.msra.mxu0 0.0
  %835 = vmatprep.subr.mxu0 0.0
  %836 = vmatpush1.msra.mxu0 0.0
  %837 = vmatprep.subr.mxu0 0.0
  %838 = vmatpush1.msra.mxu0 0.0
  %839 = vmatprep.subr.mxu0 0.0
  %840 = vmatpush1.msra.mxu0 0.0
  %841 = vmatprep.subr.mxu0 0.0
  %842 = vmatpush1.msra.mxu0 0.0
  %843 = vmatprep.subr.mxu0 0.0
  %844 = vmatpush1.msra.mxu0 0.0
  %845 = vmatprep.subr.mxu0 0.0
  %846 = vmatpush1.msra.mxu0 0.0
  %847 = vmatprep.subr.mxu0 0.0
  %848 = vmatpush1.msra.mxu0 0.0
  %849 = vmatprep.subr.mxu0 0.0
  %850 = vmatpush1.msra.mxu0 0.0
  %851 = vmatprep.subr.mxu0 0.0
  %852 = vmatpush1.msra.mxu0 0.0
  %853 = vmatprep.subr.mxu0 0.0
  %854 = vmatpush1.msra.mxu0 0.0
  %855 = vmatprep.subr.mxu0 0.0
  %856 = vmatpush1.msra.mxu0 0.0
  %857 = vmatprep.mubr.f32.mxu0 0.0
  %v858 = vand.u32 %v501, 4294901760
  %v859 = vsub.f32 %v501, %v858
  %v860 = vand.u32 %v859, 4294901760
  %861 = vmatmul.mubr.f32.gmra.mrb[0].mxu0 %v860
  %v862 = vpop.f32.mrb[0].mxu0
  %v863 = vadd.f32 %v782, %v862
  %v864 = vpop.f32.mrb[0].mxu0
  %865 = vdwg.mxu0
  %866 = vmatprep.subr.mxu0 0.0
  %v867 = vand.u32 %v484, 4294901760
  %v868 = vsub.f32 %v484, %v867
  %v869 = vand.u32 %v868, 4294901760
  %870 = vmatpush1.msra.mxu0 %v869
  %871 = vmatprep.subr.mxu0 0.0
  %v872 = vand.u32 %v485, 4294901760
  %v873 = vsub.f32 %v485, %v872
  %v874 = vand.u32 %v873, 4294901760
  %875 = vmatpush1.msra.mxu0 %v874
  %876 = vmatprep.subr.mxu0 0.0
  %v877 = vand.u32 %v486, 4294901760
  %v878 = vsub.f32 %v486, %v877
  %v879 = vand.u32 %v878, 4294901760
  %880 = vmatpush1.msra.mxu0 %v879
  %881 = vmatprep.subr.mxu0 0.0
  %v882 = vand.u32 %v487, 4294901760
  %v883 = vsub.f32 %v487, %v882
  %v884 = vand.u32 %v883, 4294901760
  %885 = vmatpush1.msra.mxu0 %v884
  %886 = vmatprep.subr.mxu0 0.0
  %v887 = vand.u32 %v488, 4294901760
  %v888 = vsub.f32 %v488, %v887
  %v889 = vand.u32 %v888, 4294901760
  %890 = vmatpush1.msra.mxu0 %v889
  %891 = vmatprep.subr.mxu0 0.0
  %v892 = vand.u32 %v489, 4294901760
  %v893 = vsub.f32 %v489, %v892
  %v894 = vand.u32 %v893, 4294901760
  %895 = vmatpush1.msra.mxu0 %v894
  %896 = vmatprep.subr.mxu0 0.0
  %v897 = vand.u32 %v490, 4294901760
  %v898 = vsub.f32 %v490, %v897
  %v899 = vand.u32 %v898, 4294901760
  %900 = vmatpush1.msra.mxu0 %v899
  %901 = vmatprep.subr.mxu0 0.0
  %v902 = vand.u32 %v491, 4294901760
  %v903 = vsub.f32 %v491, %v902
  %v904 = vand.u32 %v903, 4294901760
  %905 = vmatpush1.msra.mxu0 %v904
  %906 = vmatprep.subr.mxu0 0.0
  %907 = vmatpush1.msra.mxu0 0.0
  %908 = vmatprep.subr.mxu0 0.0
  %909 = vmatpush1.msra.mxu0 0.0
  %910 = vmatprep.subr.mxu0 0.0
  %911 = vmatpush1.msra.mxu0 0.0
  %912 = vmatprep.subr.mxu0 0.0
  %913 = vmatpush1.msra.mxu0 0.0
  %914 = vmatprep.subr.mxu0 0.0
  %915 = vmatpush1.msra.mxu0 0.0
  %916 = vmatprep.subr.mxu0 0.0
  %917 = vmatpush1.msra.mxu0 0.0
  %918 = vmatprep.subr.mxu0 0.0
  %919 = vmatpush1.msra.mxu0 0.0
  %920 = vmatprep.subr.mxu0 0.0
  %921 = vmatpush1.msra.mxu0 0.0
  %922 = vmatprep.subr.mxu0 0.0
  %923 = vmatpush1.msra.mxu0 0.0
  %924 = vmatprep.subr.mxu0 0.0
  %925 = vmatpush1.msra.mxu0 0.0
  %926 = vmatprep.subr.mxu0 0.0
  %927 = vmatpush1.msra.mxu0 0.0
  %928 = vmatprep.subr.mxu0 0.0
  %929 = vmatpush1.msra.mxu0 0.0
  %930 = vmatprep.subr.mxu0 0.0
  %931 = vmatpush1.msra.mxu0 0.0
  %932 = vmatprep.subr.mxu0 0.0
  %933 = vmatpush1.msra.mxu0 0.0
  %934 = vmatprep.subr.mxu0 0.0
  %935 = vmatpush1.msra.mxu0 0.0
  %936 = vmatprep.subr.mxu0 0.0
  %937 = vmatpush1.msra.mxu0 0.0
  %938 = vmatprep.subr.mxu0 0.0
  %939 = vmatpush1.msra.mxu0 0.0
  %940 = vmatprep.subr.mxu0 0.0
  %941 = vmatpush1.msra.mxu0 0.0
  %942 = vmatprep.subr.mxu0 0.0
  %943 = vmatpush1.msra.mxu0 0.0
  %944 = vmatprep.subr.mxu0 0.0
  %945 = vmatpush1.msra.mxu0 0.0
  %946 = vmatprep.subr.mxu0 0.0
  %947 = vmatpush1.msra.mxu0 0.0
  %948 = vmatprep.subr.mxu0 0.0
  %949 = vmatpush1.msra.mxu0 0.0
  %950 = vmatprep.subr.mxu0 0.0
  %951 = vmatpush1.msra.mxu0 0.0
  %952 = vmatprep.subr.mxu0 0.0
  %953 = vmatpush1.msra.mxu0 0.0
  %954 = vmatprep.mubr.f32.mxu0 0.0
  %v955 = vand.u32 %v501, 4294901760
  %956 = vmatmul.mubr.f32.gmra.mrb[0].mxu0 %v955
  %v957 = vpop.f32.mrb[0].mxu0
  %v958 = vadd.f32 %v863, %v957
  %v959 = vpop.f32.mrb[0].mxu0
  %960 = vdwg.mxu0
  %961 = vmatprep.subr.mxu0 0.0
  %v962 = vand.u32 %v484, 4294901760
  %963 = vmatpush1.msra.mxu0 %v962
  %964 = vmatprep.subr.mxu0 0.0
  %v965 = vand.u32 %v485, 4294901760
  %966 = vmatpush1.msra.mxu0 %v965
  %967 = vmatprep.subr.mxu0 0.0
  %v968 = vand.u32 %v486, 4294901760
  %969 = vmatpush1.msra.mxu0 %v968
  %970 = vmatprep.subr.mxu0 0.0
  %v971 = vand.u32 %v487, 4294901760
  %972 = vmatpush1.msra.mxu0 %v971
  %973 = vmatprep.subr.mxu0 0.0
  %v974 = vand.u32 %v488, 4294901760
  %975 = vmatpush1.msra.mxu0 %v974
  %976 = vmatprep.subr.mxu0 0.0
  %v977 = vand.u32 %v489, 4294901760
  %978 = vmatpush1.msra.mxu0 %v977
  %979 = vmatprep.subr.mxu0 0.0
  %v980 = vand.u32 %v490, 4294901760
  %981 = vmatpush1.msra.mxu0 %v980
  %982 = vmatprep.subr.mxu0 0.0
  %v983 = vand.u32 %v491, 4294901760
  %984 = vmatpush1.msra.mxu0 %v983
  %985 = vmatprep.subr.mxu0 0.0
  %986 = vmatpush1.msra.mxu0 0.0
  %987 = vmatprep.subr.mxu0 0.0
  %988 = vmatpush1.msra.mxu0 0.0
  %989 = vmatprep.subr.mxu0 0.0
  %990 = vmatpush1.msra.mxu0 0.0
  %991 = vmatprep.subr.mxu0 0.0
  %992 = vmatpush1.msra.mxu0 0.0
  %993 = vmatprep.subr.mxu0 0.0
  %994 = vmatpush1.msra.mxu0 0.0
  %995 = vmatprep.subr.mxu0 0.0
  %996 = vmatpush1.msra.mxu0 0.0
  %997 = vmatprep.subr.mxu0 0.0
  %998 = vmatpush1.msra.mxu0 0.0
  %999 = vmatprep.subr.mxu0 0.0
  %1000 = vmatpush1.msra.mxu0 0.0
  %1001 = vmatprep.subr.mxu0 0.0
  %1002 = vmatpush1.msra.mxu0 0.0
  %1003 = vmatprep.subr.mxu0 0.0
  %1004 = vmatpush1.msra.mxu0 0.0
  %1005 = vmatprep.subr.mxu0 0.0
  %1006 = vmatpush1.msra.mxu0 0.0
  %1007 = vmatprep.subr.mxu0 0.0
  %1008 = vmatpush1.msra.mxu0 0.0
  %1009 = vmatprep.subr.mxu0 0.0
  %1010 = vmatpush1.msra.mxu0 0.0
  %1011 = vmatprep.subr.mxu0 0.0
  %1012 = vmatpush1.msra.mxu0 0.0
  %1013 = vmatprep.subr.mxu0 0.0
  %1014 = vmatpush1.msra.mxu0 0.0
  %1015 = vmatprep.subr.mxu0 0.0
  %1016 = vmatpush1.msra.mxu0 0.0
  %1017 = vmatprep.subr.mxu0 0.0
  %1018 = vmatpush1.msra.mxu0 0.0
  %1019 = vmatprep.subr.mxu0 0.0
  %1020 = vmatpush1.msra.mxu0 0.0
  %1021 = vmatprep.subr.mxu0 0.0
  %1022 = vmatpush1.msra.mxu0 0.0
  %1023 = vmatprep.subr.mxu0 0.0
  %1024 = vmatpush1.msra.mxu0 0.0
  %1025 = vmatprep.subr.mxu0 0.0
  %1026 = vmatpush1.msra.mxu0 0.0
  %1027 = vmatprep.subr.mxu0 0.0
  %1028 = vmatpush1.msra.mxu0 0.0
  %1029 = vmatprep.subr.mxu0 0.0
  %1030 = vmatpush1.msra.mxu0 0.0
  %1031 = vmatprep.subr.mxu0 0.0
  %1032 = vmatpush1.msra.mxu0 0.0
  %1033 = vmatprep.mubr.f32.mxu0 0.0
  %v1034 = vand.u32 %v501, 4294901760
  %1035 = vmatmul.mubr.f32.gmra.mrb[0].mxu0 %v1034
  %v1036 = vpop.f32.mrb[0].mxu0
  %v1037 = vadd.f32 %v958, %v1036
  %v1038 = vpop.f32.mrb[0].mxu0
  %1039 = vdwg.mxu0
  %v1040 = vsel %vm29, %v1037, -inf
  %1041 = vmax.xlane.f32.xlu0 %v1040
  %v1042 = vpop.xlane.xlu0 %1041
  %v1043 = vsub.f32 %v1037, %v1042
  %v1044 = vmul.f32 %v1043, 1.442695
  %v1045 = vpow.pop %v1044
  %v1046 = vsel %vm29, %v1045, 0.0
  %1047 = vadd.xlane.f32.xlu0 %v1046
  %v1048 = vpop.xlane.xlu0 %1047
  %v1049 = vrcp.pop %v1048
  %v1050 = vmul.f32 %v1045, %v1049
  %1051 = vst.msk [vmem:[%s5] sm:$0xff] %vm29, %v1050
  // Predicated region
  $region22: #{tpu_custom_call.1} parent=0 // pred_check
    _
  $region23: #{tpu_custom_call.1} parent=0 // pred_check_branch
    %1053 = sbr.rel (0) target = $region25
  $region24: #{tpu_custom_call.1} parent=0 // pred_region
    _
  $region25: #{tpu_custom_call.1} parent=0 // pred_fallthru
    _
  // Predicated region
  $region26: #{tpu_custom_call.1} parent=0 // pred_check
    _
  $region27: #{tpu_custom_call.1} parent=0 // pred_check_branch
    %1055 = sbr.rel (0) target = $region29
  $region28: #{tpu_custom_call.1} parent=0 // pred_region
    _
  $region29: #{tpu_custom_call.1} parent=0 // pred_fallthru
    _

</llo_original>
